<compile_context>
chip_gen: v7x
topology: tpu7x:2x2x1
jax: 0.10.0
libtpu: 0.0.40
codegen_flags: <defaults>
</compile_context>

<pallas_src>
import jax
import jax.numpy as jnp
from jax.experimental import pallas as pl
from jax.experimental.pallas import tpu as pltpu

LANE = 128     # padded fc3 output width inside the kernel (full vreg lane dim)
HIDDEN = 128


def _round_up(x, m):
    return (x + m - 1) // m * m


def qnet_kernel(x_ref, w1_ref, b1_ref, w2_ref, b2_ref, w3_ref, b3_ref, o_ref):
    # fc1: narrow-K f32 matmul (K = input_size); tiny share of MXU work, huge MXU slack.
    h = jnp.dot(x_ref[...], w1_ref[...],
                preferred_element_type=jnp.float32) + b1_ref[...]
    h = jnp.maximum(h, 0.0)
    # fc2: 128x128 bf16 MXU matmul, f32 accumulation; epilogue stays f32 (v5e VPU has no bf16).
    h = jnp.dot(h.astype(jnp.bfloat16), w2_ref[...],
                preferred_element_type=jnp.float32) + b2_ref[...]
    h = jnp.maximum(h, 0.0)
    # fc3: bf16 matmul against the 128-column zero-padded W3 (standard MXU shape),
    # then store only the real (narrow) output columns -> ~16x less output HBM traffic.
    out = jnp.dot(h.astype(jnp.bfloat16), w3_ref[...],
                  preferred_element_type=jnp.float32) + b3_ref[...]
    o_ref[...] = out[:, : o_ref.shape[-1]].astype(o_ref.dtype)


def _batch_tiling(batch, tb):
    b_pad8 = _round_up(max(batch, 1), 8)
    # Force >= 2 tiles whenever possible so the "parallel" batch axis shards across
    # both TensorCores on v7x; pick balanced tiles so padding waste is <= 8 rows/tile.
    min_tiles = 2 if b_pad8 >= 16 else 1
    n_tiles = max(pl.cdiv(b_pad8, tb), min_tiles)
    tile = _round_up(pl.cdiv(b_pad8, n_tiles), 8)
    b_pad = _round_up(b_pad8, tile)
    return tile, b_pad


def qnet_forward(x, params, *, tb=4096):
    """x: [B, input_size] f32 -> [B, action_size] f32 (same math as QNet.forward)."""
    w1, b1, w2, b2, w3, b3 = params["weights"]
    action_size = params["action_size"]
    input_size = params["input_size"]
    B = x.shape[0]
    assert x.shape[1] == input_size

    x = x.astype(jnp.float32)
    TB, B_pad = _batch_tiling(B, tb)
    if B_pad != B:
        x = jnp.zeros((B_pad, input_size), jnp.float32).at[:B].set(x)

    out_pad = _round_up(action_size, 8)
    grid = (B_pad // TB,)
    out = pl.pallas_call(
        qnet_kernel,
        out_shape=jax.ShapeDtypeStruct((B_pad, out_pad), jnp.float32),
        grid=grid,
        in_specs=[
            pl.BlockSpec((TB, input_size), lambda i: (i, 0)),      # x batch tile (narrow)
            pl.BlockSpec((input_size, HIDDEN), lambda i: (0, 0)),  # W1 (f32, VMEM-resident)
            pl.BlockSpec((1, HIDDEN), lambda i: (0, 0)),           # b1
            pl.BlockSpec((HIDDEN, HIDDEN), lambda i: (0, 0)),      # W2 (bf16)
            pl.BlockSpec((1, HIDDEN), lambda i: (0, 0)),           # b2
            pl.BlockSpec((HIDDEN, LANE), lambda i: (0, 0)),        # W3 (bf16, col-padded)
            pl.BlockSpec((1, LANE), lambda i: (0, 0)),             # b3 (col-padded)
        ],
        out_specs=pl.BlockSpec((TB, out_pad), lambda i: (i, 0)),   # narrow output slab
        compiler_params=pltpu.CompilerParams(
            dimension_semantics=("parallel",),                     # shards across TCs on v7x
            vmem_limit_bytes=32 * 1024 * 1024,                     # inside v7x's 64 MiB
        ),
    )(x, w1, b1, w2, b2, w3, b3)
    # Tiny slice (32 B/row) back to the logical shape; padded Q columns never leak.
    return out[:B, :action_size]


def init_qnet_params(key, mask, agents_num, goals_num, action_size, hidden=HIDDEN):
    """PyTorch-default-style init (U(-1/sqrt(fan_in), 1/sqrt(fan_in))).
    W1 kept narrow in f32; W2/W3 stored in bf16 for the MXU; W3/b3 column-padded to 128."""
    input_size = 2 if mask else agents_num * 2 + goals_num * 2
    assert input_size <= LANE and action_size <= LANE and hidden == HIDDEN

    def linear(k, fan_in, fan_out, pad_out, w_dtype):
        kw, kb = jax.random.split(k)
        bound = 1.0 / jnp.sqrt(jnp.float32(fan_in))
        w = jax.random.uniform(kw, (fan_in, fan_out), jnp.float32, -bound, bound)
        b = jax.random.uniform(kb, (1, fan_out), jnp.float32, -bound, bound)
        w_p = jnp.zeros((fan_in, pad_out), jnp.float32).at[:, :fan_out].set(w)
        b_p = jnp.zeros((1, pad_out), jnp.float32).at[:, :fan_out].set(b)
        return w_p.astype(w_dtype), b_p

    k1, k2, k3 = jax.random.split(key, 3)
    w1, b1 = linear(k1, input_size, hidden, hidden, jnp.float32)   # narrow-K f32 layer
    w2, b2 = linear(k2, hidden, hidden, hidden, jnp.bfloat16)
    w3, b3 = linear(k3, hidden, action_size, LANE, jnp.bfloat16)   # col-padded to 128
    return {"weights": (w1, b1, w2, b2, w3, b3),
            "action_size": action_size,
            "input_size": input_size}


def _reference(x, params):
    """Plain-JAX reference with the same dtype recipe as the kernel."""
    w1, b1, w2, b2, w3, b3 = params["weights"]
    action_size = params["action_size"]
    h = jnp.maximum(jnp.dot(x.astype(jnp.float32), w1,
                            preferred_element_type=jnp.float32) + b1, 0.0)
    h = jnp.maximum(jnp.dot(h.astype(jnp.bfloat16), w2,
                            preferred_element_type=jnp.float32) + b2, 0.0)
    out = jnp.dot(h.astype(jnp.bfloat16), w3,
                  preferred_element_type=jnp.float32) + b3
    return out[:, :action_size]


if __name__ == "__main__":
    # Module config: mask=False, agents_num=2, goals_num=2 -> input_size = 8
    agents_num, goals_num, action_size = 2, 2, 5

    key = jax.random.PRNGKey(0)
    kx, kx2, kp = jax.random.split(key, 3)
    params = init_qnet_params(kp, False, agents_num, goals_num, action_size)
    input_size = params["input_size"]

    # Case 1: tiny batch, single tile.
    batch = 8
    x = jax.random.normal(kx, (batch, input_size), jnp.float32)
    out = jax.block_until_ready(qnet_forward(x, params))
    assert out.shape == (batch, action_size)
    ref = _reference(x, params)
    assert jnp.allclose(out, ref, atol=1e-2, rtol=1e-2), (
        f"max abs err {jnp.max(jnp.abs(out - ref))}")

    # Case 2: batch not a multiple of the tile -> exercises row padding + 2-tile grid.
    batch2 = 40
    x2 = jax.random.normal(kx2, (batch2, input_size), jnp.float32)
    out2 = jax.block_until_ready(qnet_forward(x2, params))
    assert out2.shape == (batch2, action_size)
    ref2 = _reference(x2, params)
    assert jnp.allclose(out2, ref2, atol=1e-2, rtol=1e-2), (
        f"max abs err {jnp.max(jnp.abs(out2 - ref2))}")

    print("KERNEL_OK")
</pallas_src>

<mosaic_0001>
module attributes {stable_mosaic.version = 11 : i64} {
  func.func @qnet_kernel(%arg0: i32, %arg1: memref<8x8xf32, #tpu.memory_space<vmem>>, %arg2: memref<8x128xf32, #tpu.memory_space<vmem>>, %arg3: memref<1x128xf32, #tpu.memory_space<vmem>>, %arg4: memref<128x128xbf16, #tpu.memory_space<vmem>>, %arg5: memref<1x128xf32, #tpu.memory_space<vmem>>, %arg6: memref<128x128xbf16, #tpu.memory_space<vmem>>, %arg7: memref<1x128xf32, #tpu.memory_space<vmem>>, %arg8: memref<8x8xf32, #tpu.memory_space<vmem>>) attributes {dimension_semantics = [#tpu.dimension_semantics<parallel>], iteration_bounds = array<i64: 1>, scalar_prefetch = 0 : i64, scratch_operands = 0 : i64, tpu.core_type = #tpu.core_type<tc>, window_params = [{transform_indices = @transform_0, window_bounds = array<i64: 8, 8>}, {pipeline_mode = #tpu.pipeline_mode<synchronous>, transform_indices = @transform_1, window_bounds = array<i64: 8, 128>}, {pipeline_mode = #tpu.pipeline_mode<synchronous>, transform_indices = @transform_2, window_bounds = array<i64: 1, 128>}, {pipeline_mode = #tpu.pipeline_mode<synchronous>, transform_indices = @transform_3, window_bounds = array<i64: 128, 128>}, {pipeline_mode = #tpu.pipeline_mode<synchronous>, transform_indices = @transform_4, window_bounds = array<i64: 1, 128>}, {pipeline_mode = #tpu.pipeline_mode<synchronous>, transform_indices = @transform_5, window_bounds = array<i64: 128, 128>}, {pipeline_mode = #tpu.pipeline_mode<synchronous>, transform_indices = @transform_6, window_bounds = array<i64: 1, 128>}, {transform_indices = @transform_7, window_bounds = array<i64: 8, 8>}]} {
    %c0 = arith.constant 0 : index
    %c0_0 = arith.constant 0 : index
    %0 = vector.load %arg1[%c0, %c0_0] : memref<8x8xf32, #tpu.memory_space<vmem>>, vector<8x8xf32>
    %c0_1 = arith.constant 0 : index
    %c0_2 = arith.constant 0 : index
    %1 = vector.load %arg2[%c0_1, %c0_2] : memref<8x128xf32, #tpu.memory_space<vmem>>, vector<8x128xf32>
    %cst = arith.constant dense<0.000000e+00> : vector<8x128xf32>
    %2 = tpu.matmul %0, %1, %cst {dimension_numbers = #tpu.dot_dimension_numbers<[1], [0], [0], [1], [0, 0, 1, 1], [], []>} : vector<8x8xf32>, vector<8x128xf32>, vector<8x128xf32> -> vector<8x128xf32>
    %c0_3 = arith.constant 0 : index
    %c0_4 = arith.constant 0 : index
    %3 = vector.load %arg3[%c0_3, %c0_4] : memref<1x128xf32, #tpu.memory_space<vmem>>, vector<1x128xf32>
    %4 = vector.broadcast %3 : vector<1x128xf32> to vector<8x128xf32>
    %5 = arith.addf %2, %4 : vector<8x128xf32>
    %cst_5 = arith.constant 0.000000e+00 : f32
    %6 = vector.broadcast %cst_5 : f32 to vector<8x128xf32>
    %7 = arith.maximumf %5, %6 : vector<8x128xf32>
    %8 = arith.truncf %7 : vector<8x128xf32> to vector<8x128xbf16>
    %c0_6 = arith.constant 0 : index
    %c0_7 = arith.constant 0 : index
    %9 = vector.load %arg4[%c0_6, %c0_7] : memref<128x128xbf16, #tpu.memory_space<vmem>>, vector<128x128xbf16>
    %cst_8 = arith.constant dense<0.000000e+00> : vector<8x128xf32>
    %10 = tpu.matmul %8, %9, %cst_8 {dimension_numbers = #tpu.dot_dimension_numbers<[1], [0], [0], [1], [0, 0, 1, 1], [], []>} : vector<8x128xbf16>, vector<128x128xbf16>, vector<8x128xf32> -> vector<8x128xf32>
    %c0_9 = arith.constant 0 : index
    %c0_10 = arith.constant 0 : index
    %11 = vector.load %arg5[%c0_9, %c0_10] : memref<1x128xf32, #tpu.memory_space<vmem>>, vector<1x128xf32>
    %12 = vector.broadcast %11 : vector<1x128xf32> to vector<8x128xf32>
    %13 = arith.addf %10, %12 : vector<8x128xf32>
    %cst_11 = arith.constant 0.000000e+00 : f32
    %14 = vector.broadcast %cst_11 : f32 to vector<8x128xf32>
    %15 = arith.maximumf %13, %14 : vector<8x128xf32>
    %16 = arith.truncf %15 : vector<8x128xf32> to vector<8x128xbf16>
    %c0_12 = arith.constant 0 : index
    %c0_13 = arith.constant 0 : index
    %17 = vector.load %arg6[%c0_12, %c0_13] : memref<128x128xbf16, #tpu.memory_space<vmem>>, vector<128x128xbf16>
    %cst_14 = arith.constant dense<0.000000e+00> : vector<8x128xf32>
    %18 = tpu.matmul %16, %17, %cst_14 {dimension_numbers = #tpu.dot_dimension_numbers<[1], [0], [0], [1], [0, 0, 1, 1], [], []>} : vector<8x128xbf16>, vector<128x128xbf16>, vector<8x128xf32> -> vector<8x128xf32>
    %c0_15 = arith.constant 0 : index
    %c0_16 = arith.constant 0 : index
    %19 = vector.load %arg7[%c0_15, %c0_16] : memref<1x128xf32, #tpu.memory_space<vmem>>, vector<1x128xf32>
    %20 = vector.broadcast %19 : vector<1x128xf32> to vector<8x128xf32>
    %21 = arith.addf %18, %20 : vector<8x128xf32>
    %22 = vector.extract_strided_slice %21 {offsets = [0, 0], sizes = [8, 8], strides = [1, 1]} : vector<8x128xf32> to vector<8x8xf32>
    %c0_17 = arith.constant 0 : index
    %c0_18 = arith.constant 0 : index
    %23 = vector.load %arg8[%c0_17, %c0_18] : memref<8x8xf32, #tpu.memory_space<vmem>>, vector<8x8xf32>
    tpu.vector_store %arg8[%c0_17, %c0_18], %22 {strides = array<i32>} : memref<8x8xf32, #tpu.memory_space<vmem>>, vector<8x8xf32>,
    return
  }
  func.func @transform_0(%arg0: i32) -> (i32, i32) {
    %c0_i32 = arith.constant 0 : i32
    %c0_i32_0 = arith.constant 0 : i32
    return %arg0, %c0_i32 : i32, i32
  }
  func.func @transform_1(%arg0: i32) -> (i32, i32) {
    %c0_i32 = arith.constant 0 : i32
    %c0_i32_0 = arith.constant 0 : i32
    %c0_i32_1 = arith.constant 0 : i32
    return %c0_i32, %c0_i32_0 : i32, i32
  }
  func.func @transform_2(%arg0: i32) -> (i32, i32) {
    %c0_i32 = arith.constant 0 : i32
    %c0_i32_0 = arith.constant 0 : i32
    %c0_i32_1 = arith.constant 0 : i32
    return %c0_i32, %c0_i32_0 : i32, i32
  }
  func.func @transform_3(%arg0: i32) -> (i32, i32) {
    %c0_i32 = arith.constant 0 : i32
    %c0_i32_0 = arith.constant 0 : i32
    %c0_i32_1 = arith.constant 0 : i32
    return %c0_i32, %c0_i32_0 : i32, i32
  }
  func.func @transform_4(%arg0: i32) -> (i32, i32) {
    %c0_i32 = arith.constant 0 : i32
    %c0_i32_0 = arith.constant 0 : i32
    %c0_i32_1 = arith.constant 0 : i32
    return %c0_i32, %c0_i32_0 : i32, i32
  }
  func.func @transform_5(%arg0: i32) -> (i32, i32) {
    %c0_i32 = arith.constant 0 : i32
    %c0_i32_0 = arith.constant 0 : i32
    %c0_i32_1 = arith.constant 0 : i32
    return %c0_i32, %c0_i32_0 : i32, i32
  }
  func.func @transform_6(%arg0: i32) -> (i32, i32) {
    %c0_i32 = arith.constant 0 : i32
    %c0_i32_0 = arith.constant 0 : i32
    %c0_i32_1 = arith.constant 0 : i32
    return %c0_i32, %c0_i32_0 : i32, i32
  }
  func.func @transform_7(%arg0: i32) -> (i32, i32) {
    %c0_i32 = arith.constant 0 : i32
    %c0_i32_0 = arith.constant 0 : i32
    return %arg0, %c0_i32 : i32, i32
  }
}

</mosaic_0001>

<llo_original>
// kernel: tpu_custom_call.1
$region0: #{tpu_custom_call.1}
  #allocation0 [shape = 'u32[]', space=smem, size = 0x4, offset = 0x4, fixed_abs, tag = 'smem constant byte address 0x4 - core index']
  #allocation1 [shape = 'u32[144,128]{1,0:T(1,128)}', space=vmem, size = 0x12000, scoped, tag = 'internal scratch']
  %s0 = inlined_call_operand.hbm [shape: f32[8,8], index: 0, kind: input, shape index: {}]
  %s1 = inlined_call_operand.hbm [shape: f32[8,128], index: 1, kind: input, shape index: {}]
  %s2 = inlined_call_operand.vmem [shape: f32[1,128], index: 2, kind: input, shape index: {}]
  %s3 = inlined_call_operand.hbm [shape: bf16[128,128], index: 3, kind: input, shape index: {}]
  %s4 = inlined_call_operand.vmem [shape: f32[1,128], index: 4, kind: input, shape index: {}]
  %s5 = inlined_call_operand.hbm [shape: bf16[128,128], index: 5, kind: input, shape index: {}]
  %s6 = inlined_call_operand.vmem [shape: f32[1,128], index: 6, kind: input, shape index: {}]
  %s7 = inlined_call_operand.hbm [shape: f32[8,8], index: 7, kind: output, shape index: {}]
  %s8 = sld [smem:[#allocation0]]
  $region54: #{tpu_custom_call.1} parent=0
    _
  %s10 = ssub.s32 1, %s8
  %s11 = scalar_select 0, %s10, %s8
  $region1: #{tpu_custom_call.1} parent=0
    #allocation2 [shape = 'u8[4096]{0}', space=vmem, size = 0x1000, scoped, tag = 'input window, operand 0, single buffered']
    #allocation3 [shape = 's32[1]{0}', space=sflag, size = 0x4, scoped, tag = 'scoped memory for tpu_custom_call.1']
    #allocation4 [shape = 's32[1]{0}', space=sflag, size = 0x4, scoped, tag = 'scoped memory for tpu_custom_call.1']
    #allocation5 [shape = 'u8[4096]{0}', space=vmem, size = 0x1000, scoped, tag = 'input window, operand 1, single buffered']
    #allocation6 [shape = 's32[1]{0}', space=sflag, size = 0x4, scoped, tag = 'scoped memory for tpu_custom_call.1']
    #allocation7 [shape = 'u8[32768]{0}', space=vmem, size = 0x8000, scoped, tag = 'input window, operand 3, single buffered']
    #allocation8 [shape = 'u8[32768]{0}', space=vmem, size = 0x8000, scoped, tag = 'input window, operand 5, single buffered']
    #allocation9 [shape = 's32[1]{0}', space=sflag, size = 0x4, scoped, tag = 'scoped memory for tpu_custom_call.1']
    #allocation10 [shape = 'u8[4096]{0}', space=vmem, size = 0x1000, scoped, tag = 'output window, operand 0, single buffered']
    %12 = vsyncpa [#allocation3], 0
    %13 = vsyncpa [#allocation6], 0
    %14 = vsyncpa [#allocation9], 0
    %15 = vsyncpa [#allocation4], 0
    // Predicated region
    $region2: #{tpu_custom_call.1} parent=1 // pred_check
      _
    $region3: #{tpu_custom_call.1} parent=1 // pred_check_branch
      %17 = sbr.rel (0) target = $region5
    $region4: #{tpu_custom_call.1} parent=1 // pred_region
      %s19 = ssub.s32 128, 128
      %20 = vsyncadd [#allocation3], %s19
      %s22 = sshll.u32 [#allocation2], 4
      %s23 = int_to_ptr.vmem [resolvable:$true] %s22
      %25 = dma.hbm_to_vmem [thread:$0]  %s0, 128, %s23, [#allocation3]
    $region5: #{tpu_custom_call.1} parent=1 // pred_fallthru
      _
    // Predicated region
    $region6: #{tpu_custom_call.1} parent=1 // pred_check
      _
    $region7: #{tpu_custom_call.1} parent=1 // pred_check_branch
      %27 = sbr.rel (0) target = $region9
    $region8: #{tpu_custom_call.1} parent=1 // pred_region
      %s29 = ssub.s32 128, 128
      %30 = vsyncadd [#allocation6], %s29
      %s32 = sshll.u32 [#allocation5], 4
      %s33 = int_to_ptr.vmem [resolvable:$true] %s32
      %35 = dma.hbm_to_vmem [thread:$0]  %s1, 128, %s33, [#allocation6]
    $region9: #{tpu_custom_call.1} parent=1 // pred_fallthru
      _
    // Predicated region
    $region10: #{tpu_custom_call.1} parent=1 // pred_check
      _
    $region11: #{tpu_custom_call.1} parent=1 // pred_check_branch
      %37 = sbr.rel (0) target = $region13
    $region12: #{tpu_custom_call.1} parent=1 // pred_region
      _
    $region13: #{tpu_custom_call.1} parent=1 // pred_fallthru
      _
    // Predicated region
    $region14: #{tpu_custom_call.1} parent=1 // pred_check
      _
    $region15: #{tpu_custom_call.1} parent=1 // pred_check_branch
      %39 = sbr.rel (0) target = $region17
    $region16: #{tpu_custom_call.1} parent=1 // pred_region
      %s41 = ssub.s32 1024, 1024
      %42 = vsyncadd [#allocation6], %s41
      %s43 = sshll.u32 [#allocation7], 4
      %s44 = int_to_ptr.vmem [resolvable:$true] %s43
      %49 = dma.hbm_to_vmem [thread:$0]  %s3, 1024, %s44, [#allocation6], 64, 64, 4
    $region17: #{tpu_custom_call.1} parent=1 // pred_fallthru
      _
    // Predicated region
    $region18: #{tpu_custom_call.1} parent=1 // pred_check
      _
    $region19: #{tpu_custom_call.1} parent=1 // pred_check_branch
      %51 = sbr.rel (0) target = $region21
    $region20: #{tpu_custom_call.1} parent=1 // pred_region
      _
    $region21: #{tpu_custom_call.1} parent=1 // pred_fallthru
      _
    // Predicated region
    $region22: #{tpu_custom_call.1} parent=1 // pred_check
      _
    $region23: #{tpu_custom_call.1} parent=1 // pred_check_branch
      %53 = sbr.rel (0) target = $region25
    $region24: #{tpu_custom_call.1} parent=1 // pred_region
      %s55 = ssub.s32 1024, 1024
      %56 = vsyncadd [#allocation9], %s55
      %s57 = sshll.u32 [#allocation8], 4
      %s58 = int_to_ptr.vmem [resolvable:$true] %s57
      %63 = dma.hbm_to_vmem [thread:$0]  %s5, 1024, %s58, [#allocation9], 64, 64, 4
    $region25: #{tpu_custom_call.1} parent=1 // pred_fallthru
      _
    // Predicated region
    $region26: #{tpu_custom_call.1} parent=1 // pred_check
      _
    $region27: #{tpu_custom_call.1} parent=1 // pred_check_branch
      %65 = sbr.rel (0) target = $region29
    $region28: #{tpu_custom_call.1} parent=1 // pred_region
      _
    $region29: #{tpu_custom_call.1} parent=1 // pred_fallthru
      _
    // Predicated region
    $region30: #{tpu_custom_call.1} parent=1 // pred_check
      _
    $region31: #{tpu_custom_call.1} parent=1 // pred_check_branch
      %67 = sbr.rel (0) target = $region33
    $region32: #{tpu_custom_call.1} parent=1 // pred_region
      %68 = dma.done [#allocation3], 128
    $region33: #{tpu_custom_call.1} parent=1 // pred_fallthru
      _
    // Predicated region
    $region34: #{tpu_custom_call.1} parent=1 // pred_check
      _
    $region35: #{tpu_custom_call.1} parent=1 // pred_check_branch
      %70 = sbr.rel (0) target = $region37
    $region36: #{tpu_custom_call.1} parent=1 // pred_region
      %71 = dma.done [#allocation6], 128
    $region37: #{tpu_custom_call.1} parent=1 // pred_fallthru
      _
    // Predicated region
    $region38: #{tpu_custom_call.1} parent=1 // pred_check
      _
    $region39: #{tpu_custom_call.1} parent=1 // pred_check_branch
      %73 = sbr.rel (0) target = $region41
    $region40: #{tpu_custom_call.1} parent=1 // pred_region
      %74 = dma.done [#allocation6], 1024
    $region41: #{tpu_custom_call.1} parent=1 // pred_fallthru
      _
    // Predicated region
    $region42: #{tpu_custom_call.1} parent=1 // pred_check
      _
    $region43: #{tpu_custom_call.1} parent=1 // pred_check_branch
      %76 = sbr.rel (0) target = $region45
    $region44: #{tpu_custom_call.1} parent=1 // pred_region
      %77 = dma.done [#allocation9], 1024
    $region45: #{tpu_custom_call.1} parent=1 // pred_fallthru
      _
    %v79 = vld [vmem:[#allocation2] sm:$0xff]
    %v80 = vld [vmem:[#allocation5] sm:$0xff]
    %v81 = vld [vmem:[%s2] sm:$0x1]
    %v83 = vlaneseq
    %v84 = vshrl.u32 %v83, 7
    %v85 = vsub.s32 0, %v84
    %v86 = vrot.slane %v81, %v85
    %vm88 = vcmask 64512
    %v90 = vsel %vm88, %v79, 0
    %92 = vmatprep.subr.mxu0 0.0
    %93 = vmatpush1.msra.mxu0 %v80
    %94 = vmatprep.subr.mxu0 0.0
    %95 = vmatpush1.msra.mxu0 0.0
    %96 = vmatprep.subr.mxu0 0.0
    %97 = vmatpush1.msra.mxu0 0.0
    %98 = vmatprep.subr.mxu0 0.0
    %99 = vmatpush1.msra.mxu0 0.0
    %100 = vmatprep.subr.mxu0 0.0
    %101 = vmatpush1.msra.mxu0 0.0
    %102 = vmatprep.subr.mxu0 0.0
    %103 = vmatpush1.msra.mxu0 0.0
    %104 = vmatprep.subr.mxu0 0.0
    %105 = vmatpush1.msra.mxu0 0.0
    %106 = vmatprep.subr.mxu0 0.0
    %107 = vmatpush1.msra.mxu0 0.0
    %108 = vmatprep.subr.mxu0 0.0
    %109 = vmatpush1.msra.mxu0 0.0
    %110 = vmatprep.subr.mxu0 0.0
    %111 = vmatpush1.msra.mxu0 0.0
    %112 = vmatprep.subr.mxu0 0.0
    %113 = vmatpush1.msra.mxu0 0.0
    %114 = vmatprep.subr.mxu0 0.0
    %115 = vmatpush1.msra.mxu0 0.0
    %116 = vmatprep.subr.mxu0 0.0
    %117 = vmatpush1.msra.mxu0 0.0
    %118 = vmatprep.subr.mxu0 0.0
    %119 = vmatpush1.msra.mxu0 0.0
    %120 = vmatprep.subr.mxu0 0.0
    %121 = vmatpush1.msra.mxu0 0.0
    %122 = vmatprep.subr.mxu0 0.0
    %123 = vmatpush1.msra.mxu0 0.0
    %124 = vmatprep.subr.mxu0 0.0
    %125 = vmatpush1.msra.mxu0 0.0
    %126 = vmatprep.subr.mxu0 0.0
    %127 = vmatpush1.msra.mxu0 0.0
    %128 = vmatprep.subr.mxu0 0.0
    %129 = vmatpush1.msra.mxu0 0.0
    %130 = vmatprep.subr.mxu0 0.0
    %131 = vmatpush1.msra.mxu0 0.0
    %132 = vmatprep.subr.mxu0 0.0
    %133 = vmatpush1.msra.mxu0 0.0
    %134 = vmatprep.subr.mxu0 0.0
    %135 = vmatpush1.msra.mxu0 0.0
    %136 = vmatprep.subr.mxu0 0.0
    %137 = vmatpush1.msra.mxu0 0.0
    %138 = vmatprep.subr.mxu0 0.0
    %139 = vmatpush1.msra.mxu0 0.0
    %140 = vmatprep.subr.mxu0 0.0
    %141 = vmatpush1.msra.mxu0 0.0
    %142 = vmatprep.subr.mxu0 0.0
    %143 = vmatpush1.msra.mxu0 0.0
    %144 = vmatprep.subr.mxu0 0.0
    %145 = vmatpush1.msra.mxu0 0.0
    %146 = vmatprep.subr.mxu0 0.0
    %147 = vmatpush1.msra.mxu0 0.0
    %148 = vmatprep.subr.mxu0 0.0
    %149 = vmatpush1.msra.mxu0 0.0
    %150 = vmatprep.subr.mxu0 0.0
    %151 = vmatpush1.msra.mxu0 0.0
    %152 = vmatprep.subr.mxu0 0.0
    %153 = vmatpush1.msra.mxu0 0.0
    %154 = vmatprep.subr.mxu0 0.0
    %155 = vmatpush1.msra.mxu0 0.0
    %156 = vmatprep.mubr.f32.mxu0 0.0
    %157 = vmatmul.mubr.f32.gmra.mrb[0].mxu0 %v90
    %v158 = vpop.f32.mrb[0].mxu0
    %v159 = vadd.f32 %v86, %v158
    %v160 = vpop.f32.mrb[0].mxu0
    %161 = vdwg.mxu0
    %v162 = vmax.f32 %v159, 0.0
    %v163 = vpack.c.bf16 %v162, %v162
    %v164 = vld [vmem:[#allocation7] sm:$0xf]
    %v165 = vld [vmem:[#allocation7 + $0x4] sm:$0xf]
    %v166 = vld [vmem:[#allocation7 + $0x8] sm:$0xf]
    %v167 = vld [vmem:[#allocation7 + $0xc] sm:$0xf]
    %v168 = vld [vmem:[#allocation7 + $0x10] sm:$0xf]
    %v169 = vld [vmem:[#allocation7 + $0x14] sm:$0xf]
    %v170 = vld [vmem:[#allocation7 + $0x18] sm:$0xf]
    %v171 = vld [vmem:[#allocation7 + $0x1c] sm:$0xf]
    %v172 = vld [vmem:[#allocation7 + $0x20] sm:$0xf]
    %v173 = vld [vmem:[#allocation7 + $0x24] sm:$0xf]
    %v174 = vld [vmem:[#allocation7 + $0x28] sm:$0xf]
    %v175 = vld [vmem:[#allocation7 + $0x2c] sm:$0xf]
    %v176 = vld [vmem:[#allocation7 + $0x30] sm:$0xf]
    %v177 = vld [vmem:[#allocation7 + $0x34] sm:$0xf]
    %v178 = vld [vmem:[#allocation7 + $0x38] sm:$0xf]
    %v179 = vld [vmem:[#allocation7 + $0x3c] sm:$0xf]
    %v180 = vld [vmem:[%s4] sm:$0x1]
    %v182 = vlaneseq
    %v183 = vshrl.u32 %v182, 7
    %v184 = vsub.s32 0, %v183
    %v185 = vrot.slane %v180, %v184
    %v203 = vunpack.c.l.b16 %v164
    %v204 = vunpack.c.l.b16 %v165
    %v205 = vunpack.c.l.b16 %v166
    %v206 = vunpack.c.l.b16 %v167
    %v207 = vunpack.c.l.b16 %v168
    %v208 = vunpack.c.l.b16 %v169
    %v209 = vunpack.c.l.b16 %v170
    %v210 = vunpack.c.l.b16 %v171
    %v211 = vunpack.c.l.b16 %v172
    %v212 = vunpack.c.l.b16 %v173
    %v213 = vunpack.c.l.b16 %v174
    %v214 = vunpack.c.l.b16 %v175
    %v215 = vunpack.c.l.b16 %v176
    %v216 = vunpack.c.l.b16 %v177
    %v217 = vunpack.c.l.b16 %v178
    %v218 = vunpack.c.l.b16 %v179
    %v219 = vpack.c.b16 %v204, %v203
    %v220 = vpack.c.b16 %v206, %v205
    %v221 = vpack.c.b16 %v208, %v207
    %v222 = vpack.c.b16 %v210, %v209
    %v223 = vpack.c.b16 %v212, %v211
    %v224 = vpack.c.b16 %v214, %v213
    %v225 = vpack.c.b16 %v216, %v215
    %v226 = vpack.c.b16 %v218, %v217
    %235 = vmatprep.subr.bf16.mxu0 0
    %236 = vmatpush1.bf16.msra.mxu0 %v219
    %237 = vmatprep.subr.bf16.mxu0 0
    %238 = vmatpush1.bf16.msra.mxu0 %v220
    %239 = vmatprep.subr.bf16.mxu0 0
    %240 = vmatpush1.bf16.msra.mxu0 %v221
    %241 = vmatprep.subr.bf16.mxu0 0
    %242 = vmatpush1.bf16.msra.mxu0 %v222
    %243 = vmatprep.subr.bf16.mxu0 0
    %244 = vmatpush1.bf16.msra.mxu0 %v223
    %245 = vmatprep.subr.bf16.mxu0 0
    %246 = vmatpush1.bf16.msra.mxu0 %v224
    %247 = vmatprep.subr.bf16.mxu0 0
    %248 = vmatpush1.bf16.msra.mxu0 %v225
    %249 = vmatprep.subr.bf16.mxu0 0
    %250 = vmatpush1.bf16.msra.mxu0 %v226
    %251 = vmatprep.subr.bf16.mxu0 0
    %252 = vmatpush1.bf16.msra.mxu0 0
    %253 = vmatprep.subr.bf16.mxu0 0
    %254 = vmatpush1.bf16.msra.mxu0 0
    %255 = vmatprep.subr.bf16.mxu0 0
    %256 = vmatpush1.bf16.msra.mxu0 0
    %257 = vmatprep.subr.bf16.mxu0 0
    %258 = vmatpush1.bf16.msra.mxu0 0
    %259 = vmatprep.subr.bf16.mxu0 0
    %260 = vmatpush1.bf16.msra.mxu0 0
    %261 = vmatprep.subr.bf16.mxu0 0
    %262 = vmatpush1.bf16.msra.mxu0 0
    %263 = vmatprep.subr.bf16.mxu0 0
    %264 = vmatpush1.bf16.msra.mxu0 0
    %265 = vmatprep.subr.bf16.mxu0 0
    %266 = vmatpush1.bf16.msra.mxu0 0
    %267 = vmatprep.mubr.bf16.mxu0 0
    %268 = vmatmul.mubr.bf16.gmra.mrb[0].mxu0 %v163
    %v269 = vpop.f32.mrb[0].mxu0
    %v270 = vadd.f32 %v185, %v269
    %v271 = vpop.f32.mrb[0].mxu0
    %v272 = vpop.f32.mrb[0].mxu0
    %v273 = vpop.f32.mrb[0].mxu0
    %274 = vdwg.mxu0
    %v275 = vmax.f32 %v270, 0.0
    %v276 = vpack.c.bf16 %v275, %v275
    %v277 = vld [vmem:[#allocation8] sm:$0xf]
    %v278 = vld [vmem:[#allocation8 + $0x4] sm:$0xf]
    %v279 = vld [vmem:[#allocation8 + $0x8] sm:$0xf]
    %v280 = vld [vmem:[#allocation8 + $0xc] sm:$0xf]
    %v281 = vld [vmem:[#allocation8 + $0x10] sm:$0xf]
    %v282 = vld [vmem:[#allocation8 + $0x14] sm:$0xf]
    %v283 = vld [vmem:[#allocation8 + $0x18] sm:$0xf]
    %v284 = vld [vmem:[#allocation8 + $0x1c] sm:$0xf]
    %v285 = vld [vmem:[#allocation8 + $0x20] sm:$0xf]
    %v286 = vld [vmem:[#allocation8 + $0x24] sm:$0xf]
    %v287 = vld [vmem:[#allocation8 + $0x28] sm:$0xf]
    %v288 = vld [vmem:[#allocation8 + $0x2c] sm:$0xf]
    %v289 = vld [vmem:[#allocation8 + $0x30] sm:$0xf]
    %v290 = vld [vmem:[#allocation8 + $0x34] sm:$0xf]
    %v291 = vld [vmem:[#allocation8 + $0x38] sm:$0xf]
    %v292 = vld [vmem:[#allocation8 + $0x3c] sm:$0xf]
    %v293 = vld [vmem:[%s6] sm:$0x1]
    %v295 = vlaneseq
    %v296 = vshrl.u32 %v295, 7
    %v297 = vsub.s32 0, %v296
    %v298 = vrot.slane %v293, %v297
    %v316 = vunpack.c.l.b16 %v277
    %v317 = vunpack.c.l.b16 %v278
    %v318 = vunpack.c.l.b16 %v279
    %v319 = vunpack.c.l.b16 %v280
    %v320 = vunpack.c.l.b16 %v281
    %v321 = vunpack.c.l.b16 %v282
    %v322 = vunpack.c.l.b16 %v283
    %v323 = vunpack.c.l.b16 %v284
    %v324 = vunpack.c.l.b16 %v285
    %v325 = vunpack.c.l.b16 %v286
    %v326 = vunpack.c.l.b16 %v287
    %v327 = vunpack.c.l.b16 %v288
    %v328 = vunpack.c.l.b16 %v289
    %v329 = vunpack.c.l.b16 %v290
    %v330 = vunpack.c.l.b16 %v291
    %v331 = vunpack.c.l.b16 %v292
    %v332 = vpack.c.b16 %v317, %v316
    %v333 = vpack.c.b16 %v319, %v318
    %v334 = vpack.c.b16 %v321, %v320
    %v335 = vpack.c.b16 %v323, %v322
    %v336 = vpack.c.b16 %v325, %v324
    %v337 = vpack.c.b16 %v327, %v326
    %v338 = vpack.c.b16 %v329, %v328
    %v339 = vpack.c.b16 %v331, %v330
    %348 = vmatprep.subr.bf16.mxu0 0
    %349 = vmatpush1.bf16.msra.mxu0 %v332
    %350 = vmatprep.subr.bf16.mxu0 0
    %351 = vmatpush1.bf16.msra.mxu0 %v333
    %352 = vmatprep.subr.bf16.mxu0 0
    %353 = vmatpush1.bf16.msra.mxu0 %v334
    %354 = vmatprep.subr.bf16.mxu0 0
    %355 = vmatpush1.bf16.msra.mxu0 %v335
    %356 = vmatprep.subr.bf16.mxu0 0
    %357 = vmatpush1.bf16.msra.mxu0 %v336
    %358 = vmatprep.subr.bf16.mxu0 0
    %359 = vmatpush1.bf16.msra.mxu0 %v337
    %360 = vmatprep.subr.bf16.mxu0 0
    %361 = vmatpush1.bf16.msra.mxu0 %v338
    %362 = vmatprep.subr.bf16.mxu0 0
    %363 = vmatpush1.bf16.msra.mxu0 %v339
    %364 = vmatprep.subr.bf16.mxu0 0
    %365 = vmatpush1.bf16.msra.mxu0 0
    %366 = vmatprep.subr.bf16.mxu0 0
    %367 = vmatpush1.bf16.msra.mxu0 0
    %368 = vmatprep.subr.bf16.mxu0 0
    %369 = vmatpush1.bf16.msra.mxu0 0
    %370 = vmatprep.subr.bf16.mxu0 0
    %371 = vmatpush1.bf16.msra.mxu0 0
    %372 = vmatprep.subr.bf16.mxu0 0
    %373 = vmatpush1.bf16.msra.mxu0 0
    %374 = vmatprep.subr.bf16.mxu0 0
    %375 = vmatpush1.bf16.msra.mxu0 0
    %376 = vmatprep.subr.bf16.mxu0 0
    %377 = vmatpush1.bf16.msra.mxu0 0
    %378 = vmatprep.subr.bf16.mxu0 0
    %379 = vmatpush1.bf16.msra.mxu0 0
    %380 = vmatprep.mubr.bf16.mxu0 0
    %381 = vmatmul.mubr.bf16.gmra.mrb[0].mxu0 %v276
    %v382 = vpop.f32.mrb[0].mxu0
    %v383 = vadd.f32 %v298, %v382
    %v384 = vpop.f32.mrb[0].mxu0
    %v385 = vpop.f32.mrb[0].mxu0
    %v386 = vpop.f32.mrb[0].mxu0
    %387 = vdwg.mxu0
    %388 = vst.msk [vmem:[#allocation10] sm:$0xff] %vm88, %v383
    // Predicated region
    $region46: #{tpu_custom_call.1} parent=1 // pred_check
      _
    $region47: #{tpu_custom_call.1} parent=1 // pred_check_branch
      %390 = sbr.rel (0) target = $region49
    $region48: #{tpu_custom_call.1} parent=1 // pred_region
      %s392 = ssub.s32 128, 128
      %393 = vsyncadd [#allocation4], %s392
      %s395 = sshll.u32 [#allocation10], 4
      %s396 = int_to_ptr.vmem [resolvable:$true] %s395
      %398 = dma.vmem_to_hbm [thread:$0]  %s396, 128, %s7, [#allocation4]
    $region49: #{tpu_custom_call.1} parent=1 // pred_fallthru
      _
    // Predicated region
    $region50: #{tpu_custom_call.1} parent=1 // pred_check
      _
    $region51: #{tpu_custom_call.1} parent=1 // pred_check_branch
      %400 = sbr.rel (0) target = $region53
    $region52: #{tpu_custom_call.1} parent=1 // pred_region
      %401 = dma.done [#allocation4], 128
    $region53: #{tpu_custom_call.1} parent=1 // pred_fallthru
      _
    %402 = vsyncpa [#allocation3], 1
    %403 = vsyncpa [#allocation6], 1
    %404 = vsyncpa [#allocation9], 1
    %405 = vsyncpa [#allocation4], 1

</llo_original>
